<compile_context>
chip_gen: v7x
topology: tpu7x:2x2x1
jax: 0.10.0
libtpu: 0.0.40
codegen_flags: <defaults>
</compile_context>

<pallas_src>
import functools

import numpy as np

import jax
import jax.numpy as jnp
from jax.experimental import pallas as pl
from jax.experimental.pallas import tpu as pltpu

_MiB = 1024 * 1024


# --------------------------------------------------------------------------
# Host-side (compile-time) helpers
# --------------------------------------------------------------------------
@functools.lru_cache(maxsize=None)
def _interp_matrix_np(out_size: int, in_size: int) -> np.ndarray:
    """Row-interpolation matrix M (out_size, in_size) such that y = M @ x
    reproduces torch F.interpolate(mode='bilinear', align_corners=True)
    along one spatial axis. Built with numpy -> compile-time constant."""
    if in_size == 1:
        return np.ones((out_size, 1), dtype=np.float32)
    if out_size == 1:
        m = np.zeros((1, in_size), dtype=np.float32)
        m[0, 0] = 1.0
        return m
    coords = np.arange(out_size, dtype=np.float64) * ((in_size - 1) / (out_size - 1))
    lo = np.clip(np.floor(coords).astype(np.int64), 0, in_size - 2)
    frac = (coords - lo).astype(np.float32)
    rows = np.arange(out_size)
    m = np.zeros((out_size, in_size), dtype=np.float32)
    m[rows, lo] += 1.0 - frac
    m[rows, lo + 1] += frac
    return m


def _vmem_capacity_bytes() -> int:
    """Physical VMEM per TensorCore; conservative fallback = v7x (64 MiB)."""
    try:
        cap = int(pltpu.get_tpu_info().vmem_capacity_bytes)
        if cap > 0:
            return cap
    except Exception:
        pass
    return 64 * _MiB


def _vmem_estimate_bytes(bb: int, hi: int, wi: int) -> int:
    """Rough per-grid-step VMEM footprint: double-buffered I/O blocks,
    resident interp matrices, and in-kernel temporaries (t/u repack + v slabs)."""
    f32 = 4
    in_blocks = 2 * bb * hi * wi * f32                      # img + ms blocks
    out_blocks = bb * (256 * 256 + 64 * 64) * f32           # img + msk blocks
    weights = (256 * hi + wi * 256 + 64 * hi + wi * 64) * f32
    temps = 2 * bb * hi * (256 + 64) * f32 + out_blocks     # t & u repack + v
    return 2 * (in_blocks + out_blocks + weights) + temps


def _pick_bb_and_vmem_limit(B: int, hi: int, wi: int) -> tuple[int, int]:
    """Largest divisor of B whose per-step footprint fits ~45% of VMEM.
    Keeps >= 2 grid steps when B > 1 so both TensorCores (v7x) get work."""
    cap = _vmem_capacity_bytes()
    budget = int(0.45 * cap)
    bb = 1
    for d in range(B, 0, -1):
        if B % d != 0:
            continue
        if B > 1 and d == B:
            continue  # guarantee >= 2 "parallel" grid steps for megacore
        if _vmem_estimate_bytes(d, hi, wi) <= budget:
            bb = d
            break
    est = _vmem_estimate_bytes(bb, hi, wi)
    # TODO(synk): images too large for even a single-image block would need an
    # extra Hi-tiling grid axis; out of scope for this module's shapes.
    vmem_limit = int(min(0.92 * cap, max(32 * _MiB, 1.5 * est)))
    return bb, vmem_limit


# --------------------------------------------------------------------------
# Kernel
# --------------------------------------------------------------------------
def _fused_resize_kernel(wh_i_ref, wwT_i_ref, wh_m_ref, wwT_m_ref,
                         img_ref, ms_ref, o_img_ref, o_msk_ref,
                         *, bb, hi, wi):
    # wh_i_ref : (256, Hi)   image height-interp matrix
    # wwT_i_ref: (Wi, 256)   image width-interp matrix (transposed)
    # wh_m_ref : (64, Hi)    mask  height-interp matrix
    # wwT_m_ref: (Wi, 64)    mask  width-interp matrix (transposed)
    # img_ref  : (bb, Hi, Wi)
    # ms_ref   : (bb, Hi, Wi)
    # o_img_ref: (bb, 1, 256, 256)
    # o_msk_ref: (bb, 1, 64, 64)
    f32 = jnp.float32

    # Load & flatten the bb images into one row-stacked slab (free when Hi%8==0).
    x_img = img_ref[...].astype(f32).reshape(bb * hi, wi)
    x_msk = ms_ref[...].astype(f32).reshape(bb * hi, wi)

    # --- width resize: ONE lane-dense matmul per branch (N = 256 / 64) -----
    t_img = jnp.dot(x_img, wwT_i_ref[...], preferred_element_type=f32)  # (bb*Hi, 256)
    t_msk = jnp.dot(x_msk, wwT_m_ref[...], preferred_element_type=f32)  # (bb*Hi, 64)

    # --- repack rows -> columns so the height resize is one matmul too -----
    # image-branch destinations are 256-wide -> every lane offset is a
    # multiple of 128 (aligned copies).
    if bb == 1:
        u_img, u_msk = t_img, t_msk
    else:
        u_img = jnp.concatenate(
            [t_img[b * hi:(b + 1) * hi, :] for b in range(bb)], axis=1)  # (Hi, bb*256)
        u_msk = jnp.concatenate(
            [t_msk[b * hi:(b + 1) * hi, :] for b in range(bb)], axis=1)  # (Hi, bb*64)

    # --- height resize: ONE lane-dense matmul per branch --------------------
    v_img = jnp.dot(wh_i_ref[...], u_img, preferred_element_type=f32)   # (256, bb*256)
    v_msk = jnp.dot(wh_m_ref[...], u_msk, preferred_element_type=f32)   # (64, bb*64)

    # --- per-image stores: 256-wide, 128-aligned column slices (image) ------
    for b in range(bb):
        o_img_ref[b, 0] = v_img[:, b * 256:(b + 1) * 256].astype(o_img_ref.dtype)
        o_msk_ref[b, 0] = v_msk[:, b * 64:(b + 1) * 64].astype(o_msk_ref.dtype)


# --------------------------------------------------------------------------
# Wrapper
# --------------------------------------------------------------------------
@jax.jit
def diw_data_aug_test_forward(img: jnp.ndarray, ms: jnp.ndarray):
    """Pallas equivalent of DIWDataAug_test.forward.

    img: (B, H, W), ms: (B, H, W)
    returns (img_resized (B,1,256,256), msk_resized (B,1,64,64))
    """
    B, Hi, Wi = img.shape
    Ho_i = Wo_i = 256
    Ho_m = Wo_m = 64

    # Compile-time constant interpolation matrices (numpy).
    wh_i = _interp_matrix_np(Ho_i, Hi)                 # (256, Hi)
    wwT_i = _interp_matrix_np(Wo_i, Wi).T.copy()       # (Wi, 256)
    wh_m = _interp_matrix_np(Ho_m, Hi)                 # (64, Hi)
    wwT_m = _interp_matrix_np(Wo_m, Wi).T.copy()       # (Wi, 64)

    bb, vmem_limit = _pick_bb_and_vmem_limit(B, Hi, Wi)
    grid = (B // bb,)

    kernel = functools.partial(_fused_resize_kernel, bb=bb, hi=Hi, wi=Wi)

    out_img, out_msk = pl.pallas_call(
        kernel,
        out_shape=(
            jax.ShapeDtypeStruct((B, 1, Ho_i, Wo_i), img.dtype),
            jax.ShapeDtypeStruct((B, 1, Ho_m, Wo_m), ms.dtype),
        ),
        grid_spec=pltpu.PrefetchScalarGridSpec(
            num_scalar_prefetch=0,
            grid=grid,
            in_specs=[
                # interp matrices: resident (constant block index)
                pl.BlockSpec((Ho_i, Hi), lambda i: (0, 0)),
                pl.BlockSpec((Wi, Wo_i), lambda i: (0, 0)),
                pl.BlockSpec((Ho_m, Hi), lambda i: (0, 0)),
                pl.BlockSpec((Wi, Wo_m), lambda i: (0, 0)),
                # batch-blocked inputs; last two block dims = full extents,
                # so the (8,128) constraint holds for any H, W.
                pl.BlockSpec((bb, Hi, Wi), lambda i: (i, 0, 0)),
                pl.BlockSpec((bb, Hi, Wi), lambda i: (i, 0, 0)),
            ],
            out_specs=[
                pl.BlockSpec((bb, 1, Ho_i, Wo_i), lambda i: (i, 0, 0, 0)),
                pl.BlockSpec((bb, 1, Ho_m, Wo_m), lambda i: (i, 0, 0, 0)),
            ],
        ),
        compiler_params=pltpu.CompilerParams(
            dimension_semantics=("parallel",),
            vmem_limit_bytes=vmem_limit,
        ),
    )(wh_i, wwT_i, wh_m, wwT_m, img, ms)

    return out_img, out_msk


# --------------------------------------------------------------------------
# Pure-JAX reference (same math, no Pallas) for sanity checking
# --------------------------------------------------------------------------
def _reference_resize(x: jnp.ndarray, out_h: int, out_w: int) -> jnp.ndarray:
    B, Hi, Wi = x.shape
    wh = jnp.asarray(_interp_matrix_np(out_h, Hi))
    ww = jnp.asarray(_interp_matrix_np(out_w, Wi))
    y = jnp.einsum("oh,bhw,pw->bop", wh, x.astype(jnp.float32), ww)
    return y[:, None].astype(x.dtype)


if __name__ == "__main__":
    key = jax.random.PRNGKey(0)
    k1, k2 = jax.random.split(key)
    B, H, W = 2, 16, 16
    img = jax.random.uniform(k1, (B, H, W), dtype=jnp.float32)
    ms = jax.random.uniform(k2, (B, H, W), dtype=jnp.float32)

    img_out, msk_out = diw_data_aug_test_forward(img, ms)
    jax.block_until_ready((img_out, msk_out))

    assert img_out.shape == (B, 1, 256, 256), img_out.shape
    assert msk_out.shape == (B, 1, 64, 64), msk_out.shape

    ref_img = _reference_resize(img, 256, 256)
    ref_msk = _reference_resize(ms, 64, 64)
    assert jnp.allclose(img_out, ref_img, atol=1e-5, rtol=1e-5)
    assert jnp.allclose(msk_out, ref_msk, atol=1e-5, rtol=1e-5)

    print("KERNEL_OK")
</pallas_src>

<mosaic_0001>
module attributes {stable_mosaic.version = 11 : i64} {
  func.func @_fused_resize_kernel(%arg0: i32, %arg1: memref<256x16xf32, #tpu.memory_space<vmem>>, %arg2: memref<16x256xf32, #tpu.memory_space<vmem>>, %arg3: memref<64x16xf32, #tpu.memory_space<vmem>>, %arg4: memref<16x64xf32, #tpu.memory_space<vmem>>, %arg5: memref<1x16x16xf32, #tpu.memory_space<vmem>>, %arg6: memref<1x16x16xf32, #tpu.memory_space<vmem>>, %arg7: memref<1x1x256x256xf32, #tpu.memory_space<vmem>>, %arg8: memref<1x1x64x64xf32, #tpu.memory_space<vmem>>) attributes {dimension_semantics = [#tpu.dimension_semantics<parallel>], iteration_bounds = array<i64: 2>, scalar_prefetch = 0 : i64, scratch_operands = 0 : i64, tpu.core_type = #tpu.core_type<tc>, window_params = [{pipeline_mode = #tpu.pipeline_mode<synchronous>, transform_indices = @transform_0, window_bounds = array<i64: 256, 16>}, {pipeline_mode = #tpu.pipeline_mode<synchronous>, transform_indices = @transform_1, window_bounds = array<i64: 16, 256>}, {pipeline_mode = #tpu.pipeline_mode<synchronous>, transform_indices = @transform_2, window_bounds = array<i64: 64, 16>}, {pipeline_mode = #tpu.pipeline_mode<synchronous>, transform_indices = @transform_3, window_bounds = array<i64: 16, 64>}, {transform_indices = @transform_4, window_bounds = array<i64: 1, 16, 16>}, {transform_indices = @transform_5, window_bounds = array<i64: 1, 16, 16>}, {transform_indices = @transform_6, window_bounds = array<i64: 1, 1, 256, 256>}, {transform_indices = @transform_7, window_bounds = array<i64: 1, 1, 64, 64>}]} {
    %c0 = arith.constant 0 : index
    %c0_0 = arith.constant 0 : index
    %c0_1 = arith.constant 0 : index
    %0 = vector.load %arg5[%c0, %c0_0, %c0_1] : memref<1x16x16xf32, #tpu.memory_space<vmem>>, vector<1x16x16xf32>
    %1 = vector.shape_cast %0 : vector<1x16x16xf32> to vector<16x16xf32>
    %c0_2 = arith.constant 0 : index
    %c0_3 = arith.constant 0 : index
    %c0_4 = arith.constant 0 : index
    %2 = vector.load %arg6[%c0_2, %c0_3, %c0_4] : memref<1x16x16xf32, #tpu.memory_space<vmem>>, vector<1x16x16xf32>
    %3 = vector.shape_cast %2 : vector<1x16x16xf32> to vector<16x16xf32>
    %c0_5 = arith.constant 0 : index
    %c0_6 = arith.constant 0 : index
    %4 = vector.load %arg2[%c0_5, %c0_6] : memref<16x256xf32, #tpu.memory_space<vmem>>, vector<16x256xf32>
    %cst = arith.constant dense<0.000000e+00> : vector<16x256xf32>
    %5 = tpu.matmul %1, %4, %cst {dimension_numbers = #tpu.dot_dimension_numbers<[1], [0], [0], [1], [0, 0, 1, 1], [], []>} : vector<16x16xf32>, vector<16x256xf32>, vector<16x256xf32> -> vector<16x256xf32>
    %c0_7 = arith.constant 0 : index
    %c0_8 = arith.constant 0 : index
    %6 = vector.load %arg4[%c0_7, %c0_8] : memref<16x64xf32, #tpu.memory_space<vmem>>, vector<16x64xf32>
    %cst_9 = arith.constant dense<0.000000e+00> : vector<16x64xf32>
    %7 = tpu.matmul %3, %6, %cst_9 {dimension_numbers = #tpu.dot_dimension_numbers<[1], [0], [0], [1], [0, 0, 1, 1], [], []>} : vector<16x16xf32>, vector<16x64xf32>, vector<16x64xf32> -> vector<16x64xf32>
    %c0_10 = arith.constant 0 : index
    %c0_11 = arith.constant 0 : index
    %8 = vector.load %arg1[%c0_10, %c0_11] : memref<256x16xf32, #tpu.memory_space<vmem>>, vector<256x16xf32>
    %cst_12 = arith.constant dense<0.000000e+00> : vector<256x256xf32>
    %9 = tpu.matmul %8, %5, %cst_12 {dimension_numbers = #tpu.dot_dimension_numbers<[1], [0], [0], [1], [0, 0, 1, 1], [], []>} : vector<256x16xf32>, vector<16x256xf32>, vector<256x256xf32> -> vector<256x256xf32>
    %c0_13 = arith.constant 0 : index
    %c0_14 = arith.constant 0 : index
    %10 = vector.load %arg3[%c0_13, %c0_14] : memref<64x16xf32, #tpu.memory_space<vmem>>, vector<64x16xf32>
    %cst_15 = arith.constant dense<0.000000e+00> : vector<64x64xf32>
    %11 = tpu.matmul %10, %7, %cst_15 {dimension_numbers = #tpu.dot_dimension_numbers<[1], [0], [0], [1], [0, 0, 1, 1], [], []>} : vector<64x16xf32>, vector<16x64xf32>, vector<64x64xf32> -> vector<64x64xf32>
    %c0_16 = arith.constant 0 : index
    %c0_17 = arith.constant 0 : index
    %c0_18 = arith.constant 0 : index
    %c0_19 = arith.constant 0 : index
    %12 = vector.load %arg7[%c0_16, %c0_17, %c0_18, %c0_19] : memref<1x1x256x256xf32, #tpu.memory_space<vmem>>, vector<1x1x256x256xf32>
    %13 = vector.shape_cast %12 : vector<1x1x256x256xf32> to vector<256x256xf32>
    %14 = vector.shape_cast %9 : vector<256x256xf32> to vector<1x1x256x256xf32>
    tpu.vector_store %arg7[%c0_16, %c0_17, %c0_18, %c0_19], %14 {strides = array<i32>} : memref<1x1x256x256xf32, #tpu.memory_space<vmem>>, vector<1x1x256x256xf32>,
    %c0_20 = arith.constant 0 : index
    %c0_21 = arith.constant 0 : index
    %c0_22 = arith.constant 0 : index
    %c0_23 = arith.constant 0 : index
    %15 = vector.load %arg8[%c0_20, %c0_21, %c0_22, %c0_23] : memref<1x1x64x64xf32, #tpu.memory_space<vmem>>, vector<1x1x64x64xf32>
    %16 = vector.shape_cast %15 : vector<1x1x64x64xf32> to vector<64x64xf32>
    %17 = vector.shape_cast %11 : vector<64x64xf32> to vector<1x1x64x64xf32>
    tpu.vector_store %arg8[%c0_20, %c0_21, %c0_22, %c0_23], %17 {strides = array<i32>} : memref<1x1x64x64xf32, #tpu.memory_space<vmem>>, vector<1x1x64x64xf32>,
    return
  }
  func.func @transform_0(%arg0: i32) -> (i32, i32) {
    %c0_i32 = arith.constant 0 : i32
    %c0_i32_0 = arith.constant 0 : i32
    %c0_i32_1 = arith.constant 0 : i32
    return %c0_i32, %c0_i32_0 : i32, i32
  }
  func.func @transform_1(%arg0: i32) -> (i32, i32) {
    %c0_i32 = arith.constant 0 : i32
    %c0_i32_0 = arith.constant 0 : i32
    %c0_i32_1 = arith.constant 0 : i32
    return %c0_i32, %c0_i32_0 : i32, i32
  }
  func.func @transform_2(%arg0: i32) -> (i32, i32) {
    %c0_i32 = arith.constant 0 : i32
    %c0_i32_0 = arith.constant 0 : i32
    %c0_i32_1 = arith.constant 0 : i32
    return %c0_i32, %c0_i32_0 : i32, i32
  }
  func.func @transform_3(%arg0: i32) -> (i32, i32) {
    %c0_i32 = arith.constant 0 : i32
    %c0_i32_0 = arith.constant 0 : i32
    %c0_i32_1 = arith.constant 0 : i32
    return %c0_i32, %c0_i32_0 : i32, i32
  }
  func.func @transform_4(%arg0: i32) -> (i32, i32, i32) {
    %c0_i32 = arith.constant 0 : i32
    %c0_i32_0 = arith.constant 0 : i32
    %c0_i32_1 = arith.constant 0 : i32
    return %arg0, %c0_i32, %c0_i32_0 : i32, i32, i32
  }
  func.func @transform_5(%arg0: i32) -> (i32, i32, i32) {
    %c0_i32 = arith.constant 0 : i32
    %c0_i32_0 = arith.constant 0 : i32
    %c0_i32_1 = arith.constant 0 : i32
    return %arg0, %c0_i32, %c0_i32_0 : i32, i32, i32
  }
  func.func @transform_6(%arg0: i32) -> (i32, i32, i32, i32) {
    %c0_i32 = arith.constant 0 : i32
    %c0_i32_0 = arith.constant 0 : i32
    %c0_i32_1 = arith.constant 0 : i32
    %c0_i32_2 = arith.constant 0 : i32
    return %arg0, %c0_i32, %c0_i32_0, %c0_i32_1 : i32, i32, i32, i32
  }
  func.func @transform_7(%arg0: i32) -> (i32, i32, i32, i32) {
    %c0_i32 = arith.constant 0 : i32
    %c0_i32_0 = arith.constant 0 : i32
    %c0_i32_1 = arith.constant 0 : i32
    %c0_i32_2 = arith.constant 0 : i32
    return %arg0, %c0_i32, %c0_i32_0, %c0_i32_1 : i32, i32, i32, i32
  }
}

</mosaic_0001>

<llo_original>
// kernel: diw_data_aug_test_forward.1
$region0: #{diw_data_aug_test_forward.1}
  #allocation0 [shape = 'u32[]', space=smem, size = 0x4, offset = 0x4, fixed_abs, tag = 'smem constant byte address 0x4 - core index']
  #allocation1 [shape = 'u32[144,128]{1,0:T(1,128)}', space=vmem, size = 0x12000, scoped, tag = 'internal scratch']
  %s0 = inlined_call_operand.hbm [shape: f32[256,16], index: 0, kind: input, shape index: {}]
  %s1 = inlined_call_operand.hbm [shape: f32[16,256], index: 1, kind: input, shape index: {}]
  %s2 = inlined_call_operand.hbm [shape: f32[64,16], index: 2, kind: input, shape index: {}]
  %s3 = inlined_call_operand.vmem [shape: f32[16,64], index: 3, kind: input, shape index: {}]
  %s4 = inlined_call_operand.hbm [shape: f32[2,16,16], index: 4, kind: input, shape index: {}]
  %s5 = inlined_call_operand.hbm [shape: f32[2,16,16], index: 5, kind: input, shape index: {}]
  %s6 = inlined_call_operand.hbm [shape: f32[2,1,256,256], index: 6, kind: output, shape index: {0}]
  %s7 = inlined_call_operand.hbm [shape: f32[2,1,64,64], index: 7, kind: output, shape index: {1}]
  %8 = xla_tuple %s6, %s7
  %s9 = sld [smem:[#allocation0]]
  $region85: #{diw_data_aug_test_forward.1} parent=0
    _
  %s11 = ssub.s32 1, %s9
  %s12 = scalar_select 0, %s11, %s9
  $region1: #{diw_data_aug_test_forward.1} parent=0
    #allocation2 [shape = 'u8[131072]{0}', space=vmem, size = 0x20000, scoped, tag = 'input window, operand 0, single buffered']
    #allocation3 [shape = 's32[2]{0}', space=sflag, size = 0x8, scoped, tag = 'scoped memory for diw_data_aug_test_forward.1']
    #allocation4 [shape = 's32[2]{0}', space=sflag, size = 0x8, scoped, tag = 'scoped memory for diw_data_aug_test_forward.1']
    #allocation5 [shape = 'u8[16384]{0}', space=vmem, size = 0x4000, scoped, tag = 'input window, operand 1, single buffered']
    #allocation6 [shape = 's32[1]{0}', space=sflag, size = 0x4, scoped, tag = 'scoped memory for diw_data_aug_test_forward.1']
    #allocation7 [shape = 'u8[32768]{0}', space=vmem, size = 0x8000, scoped, tag = 'input window, operand 2, single buffered']
    #allocation8 [shape = 'u8[16384]{0}', space=vmem, size = 0x4000, scoped, tag = 'input window, operand 4']
    #allocation9 [shape = 's32[2]{0}', space=sflag, size = 0x8, scoped, tag = 'scoped memory for diw_data_aug_test_forward.1']
    #allocation10 [shape = 'u8[16384]{0}', space=vmem, size = 0x4000, scoped, tag = 'input window, operand 5']
    #allocation11 [shape = 'u8[524288]{0}', space=vmem, size = 0x80000, scoped, tag = 'output window, operand 0']
    #allocation12 [shape = 'u8[65536]{0}', space=vmem, size = 0x10000, scoped, tag = 'output window, operand 1']
    #allocation13 [shape = 's32[2]{0}', space=sflag, size = 0x8, scoped, tag = 'scoped memory for diw_data_aug_test_forward.1']
    %13 = vsyncpa [#allocation3], 0
    %14 = vsyncpa [#allocation6], 0
    %15 = vsyncpa [#allocation9], 0
    %s16 = scalar_lea.sflag [#allocation9], 1
    %17 = vsyncpa %s16, 0
    %18 = vsyncpa [#allocation4], 0
    %s19 = scalar_lea.sflag [#allocation4], 1
    %20 = vsyncpa %s19, 0
    %21 = vsyncpa [#allocation13], 0
    %s22 = scalar_lea.sflag [#allocation13], 1
    %23 = vsyncpa %s22, 0
    loop: start=0, step=1, limit=4
    $region2: #{diw_data_aug_test_forward.1} parent=1 // loop_pre_header
      _
    $region3: #{diw_data_aug_test_forward.1} parent=1 // loop_header
      %s25 = sphi 0, %s29
      %p26 = scmp.ge.s32.totalorder %s25, 4
      %s33 = sphi 0, %s33
      %s35 = sphi 0, %s33
      %s36 = sphi 0, %s35
      %s50 = sphi 0, %s36
      %s54 = sphi 0, %s54
      %s56 = sphi 0, %s54
      %s57 = sphi 0, %s56
      %s71 = sphi 0, %s57
      %s75 = sphi 0, %s75
      %s77 = sphi 0, %s75
      %s78 = sphi 0, %s77
      %s92 = sphi 0, %s78
      %s96 = sphi 0, %s96
      %s98 = sphi 0, %s96
      %s99 = sphi 0, %s98
      %s113 = sphi 0, %s99
      %s119 = sphi 0, %s121
      %s122 = sphi 0, %s119
      %s123 = sphi 0, %s122
      %s139 = sphi 0, %s123
      %s145 = sphi 0, %s147
      %s148 = sphi 0, %s145
      %s149 = sphi 0, %s148
      %s165 = sphi 0, %s149
      %s171 = sphi 0, %s173
      %s174 = sphi 0, %s171
      %s175 = sphi 0, %s174
      %s191 = sphi 0, %s175
      %s197 = sphi 0, %s199
      %s200 = sphi 0, %s197
      %s201 = sphi 0, %s200
      %s217 = sphi 0, %s201
    $region4: #{diw_data_aug_test_forward.1} parent=1 // loop_header_branch
      %28 = sbr.rel (%p26) target = $region8
    $region5: #{diw_data_aug_test_forward.1} parent=1 // loop_body
      %s30 = ssub.s32 %s25, 1
      %s31 = ssub.s32 %s25, 2
      %s32 = sadd.s32 %s25, 1
      %s34 = sadd.s32 %s33, 1
      %p37 = scmp.eq.s32.totalorder %s25, 1
      %p38 = scmp.ne.s32.totalorder %s33, %s35
      %p39 = scmp.eq.s32.totalorder %s25, 0
      %p40 = por %p38, %p39
      %p41 = scmp.ne.s32.totalorder %s33, %s35
      %p42 = scmp.eq.s32.totalorder %s30, 1
      %p43 = por %p41, %p42
      %p44 = scmp.ne.s32.totalorder %s35, %s36
      %p45 = scmp.eq.s32.totalorder %s30, 0
      %p46 = por %p44, %p45
      %p47 = scmp.ne.s32.totalorder %s35, %s36
      %p48 = scmp.eq.s32.totalorder %s31, 1
      %p49 = por %p47, %p48
      %p51 = scmp.ne.s32.totalorder %s36, %s50
      %p52 = scmp.eq.s32.totalorder %s31, 0
      %p53 = por %p51, %p52
      %s55 = sadd.s32 %s54, 1
      %p58 = scmp.eq.s32.totalorder %s25, 1
      %p59 = scmp.ne.s32.totalorder %s54, %s56
      %p60 = scmp.eq.s32.totalorder %s25, 0
      %p61 = por %p59, %p60
      %p62 = scmp.ne.s32.totalorder %s54, %s56
      %p63 = scmp.eq.s32.totalorder %s30, 1
      %p64 = por %p62, %p63
      %p65 = scmp.ne.s32.totalorder %s56, %s57
      %p66 = scmp.eq.s32.totalorder %s30, 0
      %p67 = por %p65, %p66
      %p68 = scmp.ne.s32.totalorder %s56, %s57
      %p69 = scmp.eq.s32.totalorder %s31, 1
      %p70 = por %p68, %p69
      %p72 = scmp.ne.s32.totalorder %s57, %s71
      %p73 = scmp.eq.s32.totalorder %s31, 0
      %p74 = por %p72, %p73
      %s76 = sadd.s32 %s75, 1
      %p79 = scmp.eq.s32.totalorder %s25, 1
      %p80 = scmp.ne.s32.totalorder %s75, %s77
      %p81 = scmp.eq.s32.totalorder %s25, 0
      %p82 = por %p80, %p81
      %p83 = scmp.ne.s32.totalorder %s75, %s77
      %p84 = scmp.eq.s32.totalorder %s30, 1
      %p85 = por %p83, %p84
      %p86 = scmp.ne.s32.totalorder %s77, %s78
      %p87 = scmp.eq.s32.totalorder %s30, 0
      %p88 = por %p86, %p87
      %p89 = scmp.ne.s32.totalorder %s77, %s78
      %p90 = scmp.eq.s32.totalorder %s31, 1
      %p91 = por %p89, %p90
      %p93 = scmp.ne.s32.totalorder %s78, %s92
      %p94 = scmp.eq.s32.totalorder %s31, 0
      %p95 = por %p93, %p94
      %s97 = sadd.s32 %s96, 1
      %p100 = scmp.eq.s32.totalorder %s25, 1
      %p101 = scmp.ne.s32.totalorder %s96, %s98
      %p102 = scmp.eq.s32.totalorder %s25, 0
      %p103 = por %p101, %p102
      %p104 = scmp.ne.s32.totalorder %s96, %s98
      %p105 = scmp.eq.s32.totalorder %s30, 1
      %p106 = por %p104, %p105
      %p107 = scmp.ne.s32.totalorder %s98, %s99
      %p108 = scmp.eq.s32.totalorder %s30, 0
      %p109 = por %p107, %p108
      %p110 = scmp.ne.s32.totalorder %s98, %s99
      %p111 = scmp.eq.s32.totalorder %s31, 1
      %p112 = por %p110, %p111
      %p114 = scmp.ne.s32.totalorder %s99, %s113
      %p115 = scmp.eq.s32.totalorder %s31, 0
      %p116 = por %p114, %p115
      %s117 = ssub.s32 %s25, %s32
      %p118 = scmp.eq.s32.totalorder %s117, 0
      %s120 = sadd.s32 %s119, 1
      %s121 = scalar_select %p118, %s119, %s120
      %p124 = pneg %p118
      %p125 = scmp.eq.s32.totalorder %s25, 1
      %p126 = por %p124, %p125
      %p127 = scmp.ne.s32.totalorder %s119, %s122
      %p128 = scmp.eq.s32.totalorder %s25, 0
      %p129 = por %p127, %p128
      %p130 = scmp.ne.s32.totalorder %s119, %s122
      %p131 = scmp.eq.s32.totalorder %s30, 1
      %p132 = por %p130, %p131
      %p133 = scmp.ne.s32.totalorder %s122, %s123
      %p134 = scmp.eq.s32.totalorder %s30, 0
      %p135 = por %p133, %p134
      %p136 = scmp.ne.s32.totalorder %s122, %s123
      %p137 = scmp.eq.s32.totalorder %s31, 1
      %p138 = por %p136, %p137
      %p140 = scmp.ne.s32.totalorder %s123, %s139
      %p141 = scmp.eq.s32.totalorder %s31, 0
      %p142 = por %p140, %p141
      %s143 = ssub.s32 %s25, %s32
      %p144 = scmp.eq.s32.totalorder %s143, 0
      %s146 = sadd.s32 %s145, 1
      %s147 = scalar_select %p144, %s145, %s146
      %p150 = pneg %p144
      %p151 = scmp.eq.s32.totalorder %s25, 1
      %p152 = por %p150, %p151
      %p153 = scmp.ne.s32.totalorder %s145, %s148
      %p154 = scmp.eq.s32.totalorder %s25, 0
      %p155 = por %p153, %p154
      %p156 = scmp.ne.s32.totalorder %s145, %s148
      %p157 = scmp.eq.s32.totalorder %s30, 1
      %p158 = por %p156, %p157
      %p159 = scmp.ne.s32.totalorder %s148, %s149
      %p160 = scmp.eq.s32.totalorder %s30, 0
      %p161 = por %p159, %p160
      %p162 = scmp.ne.s32.totalorder %s148, %s149
      %p163 = scmp.eq.s32.totalorder %s31, 1
      %p164 = por %p162, %p163
      %p166 = scmp.ne.s32.totalorder %s149, %s165
      %p167 = scmp.eq.s32.totalorder %s31, 0
      %p168 = por %p166, %p167
      %s169 = ssub.s32 %s25, %s32
      %p170 = scmp.eq.s32.totalorder %s169, 0
      %s172 = sadd.s32 %s171, 1
      %s173 = scalar_select %p170, %s171, %s172
      %p176 = pneg %p170
      %p177 = scmp.eq.s32.totalorder %s25, 1
      %p178 = por %p176, %p177
      %p179 = scmp.ne.s32.totalorder %s171, %s174
      %p180 = scmp.eq.s32.totalorder %s25, 0
      %p181 = por %p179, %p180
      %p182 = scmp.ne.s32.totalorder %s171, %s174
      %p183 = scmp.eq.s32.totalorder %s30, 1
      %p184 = por %p182, %p183
      %p185 = scmp.ne.s32.totalorder %s174, %s175
      %p186 = scmp.eq.s32.totalorder %s30, 0
      %p187 = por %p185, %p186
      %p188 = scmp.ne.s32.totalorder %s174, %s175
      %p189 = scmp.eq.s32.totalorder %s31, 1
      %p190 = por %p188, %p189
      %p192 = scmp.ne.s32.totalorder %s175, %s191
      %p193 = scmp.eq.s32.totalorder %s31, 0
      %p194 = por %p192, %p193
      %s195 = ssub.s32 %s25, %s32
      %p196 = scmp.eq.s32.totalorder %s195, 0
      %s198 = sadd.s32 %s197, 1
      %s199 = scalar_select %p196, %s197, %s198
      %p202 = pneg %p196
      %p203 = scmp.eq.s32.totalorder %s25, 1
      %p204 = por %p202, %p203
      %p205 = scmp.ne.s32.totalorder %s197, %s200
      %p206 = scmp.eq.s32.totalorder %s25, 0
      %p207 = por %p205, %p206
      %p208 = scmp.ne.s32.totalorder %s197, %s200
      %p209 = scmp.eq.s32.totalorder %s30, 1
      %p210 = por %p208, %p209
      %p211 = scmp.ne.s32.totalorder %s200, %s201
      %p212 = scmp.eq.s32.totalorder %s30, 0
      %p213 = por %p211, %p212
      %p214 = scmp.ne.s32.totalorder %s200, %s201
      %p215 = scmp.eq.s32.totalorder %s31, 1
      %p216 = por %p214, %p215
      %p218 = scmp.ne.s32.totalorder %s201, %s217
      %p219 = scmp.eq.s32.totalorder %s31, 0
      %p220 = por %p218, %p219
      %p221 = scmp.le.s32.totalorder 1, %s25
      %p222 = scmp.lt.s32.totalorder %s25, 3
      %p223 = pnand %p221, %p222
      %p224 = pneg %p223
      // Predicated region
      $region9: #{diw_data_aug_test_forward.1} parent=5 // pred_check
        _
      $region10: #{diw_data_aug_test_forward.1} parent=5 // pred_check_branch
        %226 = sbr.rel (%p223) target = $region12
      $region11: #{diw_data_aug_test_forward.1} parent=5 // pred_region
        %s227 = ssub.s32 %s25, 1
        // Predicated region
        $region13: #{diw_data_aug_test_forward.1} parent=11 // pred_check
          %p228 = pneg %p46
        $region14: #{diw_data_aug_test_forward.1} parent=11 // pred_check_branch
          %230 = sbr.rel (%p228) target = $region16
        $region15: #{diw_data_aug_test_forward.1} parent=11 // pred_region
          %s232 = ssub.s32 4096, 4096
          %233 = vsyncadd [#allocation3], %s232
          %s234 = sshll.u32 [#allocation2], 4
          %s235 = int_to_ptr.vmem [resolvable:$true] %s234
          %240 = dma.hbm_to_vmem [thread:$0]  %s0, 4096, %s235, [#allocation3], 128, 128, 8
        $region16: #{diw_data_aug_test_forward.1} parent=11 // pred_fallthru
          _
        // Predicated region
        $region17: #{diw_data_aug_test_forward.1} parent=11 // pred_check
          %p241 = pneg %p67
        $region18: #{diw_data_aug_test_forward.1} parent=11 // pred_check_branch
          %243 = sbr.rel (%p241) target = $region20
        $region19: #{diw_data_aug_test_forward.1} parent=11 // pred_region
          %s245 = ssub.s32 512, 512
          %246 = vsyncadd [#allocation6], %s245
          %s247 = sshll.u32 [#allocation5], 4
          %s248 = int_to_ptr.vmem [resolvable:$true] %s247
          %253 = dma.hbm_to_vmem [thread:$0]  %s1, 512, %s248, [#allocation6], 256, 256, 16
        $region20: #{diw_data_aug_test_forward.1} parent=11 // pred_fallthru
          _
        // Predicated region
        $region21: #{diw_data_aug_test_forward.1} parent=11 // pred_check
          %p254 = pneg %p88
        $region22: #{diw_data_aug_test_forward.1} parent=11 // pred_check_branch
          %256 = sbr.rel (%p254) target = $region24
        $region23: #{diw_data_aug_test_forward.1} parent=11 // pred_region
          %s258 = ssub.s32 1024, 1024
          %259 = vsyncadd [#allocation6], %s258
          %s260 = sshll.u32 [#allocation7], 4
          %s261 = int_to_ptr.vmem [resolvable:$true] %s260
          %266 = dma.hbm_to_vmem [thread:$0]  %s2, 1024, %s261, [#allocation6], 128, 128, 8
        $region24: #{diw_data_aug_test_forward.1} parent=11 // pred_fallthru
          _
        // Predicated region
        $region25: #{diw_data_aug_test_forward.1} parent=11 // pred_check
          %p267 = pneg %p109
        $region26: #{diw_data_aug_test_forward.1} parent=11 // pred_check_branch
          %269 = sbr.rel (%p267) target = $region28
        $region27: #{diw_data_aug_test_forward.1} parent=11 // pred_region
          _
        $region28: #{diw_data_aug_test_forward.1} parent=11 // pred_fallthru
          _
      $region12: #{diw_data_aug_test_forward.1} parent=5 // pred_fallthru
        _
      %p270 = scmp.lt.s32.totalorder %s25, 2
      // Predicated region
      $region29: #{diw_data_aug_test_forward.1} parent=5 // pred_check
        %p271 = pneg %p270
      $region30: #{diw_data_aug_test_forward.1} parent=5 // pred_check_branch
        %273 = sbr.rel (%p271) target = $region32
      $region31: #{diw_data_aug_test_forward.1} parent=5 // pred_region
        // Predicated region
        $region33: #{diw_data_aug_test_forward.1} parent=31 // pred_check
          %p274 = pneg %p129
        $region34: #{diw_data_aug_test_forward.1} parent=31 // pred_check_branch
          %276 = sbr.rel (%p274) target = $region36
        $region35: #{diw_data_aug_test_forward.1} parent=31 // pred_region
          %s277 = sand.u32 %s25, 1
          %s278 = scalar_lea.sflag [#allocation9], %s277
          %s279 = sand.u32 %s119, 1
          %s280 = smul.addr %s279, 16
          %s281 = scalar_lea.vmem [#allocation8], %s280
          %s283 = ssub.s32 256, 256
          %284 = vsyncadd %s278, %s283
          %s285 = smul.addr %s25, 2
          %s286 = smul.addr %s285, 128
          %s287 = scalar_lea.hbm %s4, %s286
          %s288 = sshll.u32 %s281, 4
          %s289 = int_to_ptr.vmem [resolvable:$true] %s288
          %294 = dma.hbm_to_vmem [thread:$0]  %s287, 256, %s289, %s278, 128, 128, 8
        $region36: #{diw_data_aug_test_forward.1} parent=31 // pred_fallthru
          _
        // Predicated region
        $region37: #{diw_data_aug_test_forward.1} parent=31 // pred_check
          %p295 = pneg %p155
        $region38: #{diw_data_aug_test_forward.1} parent=31 // pred_check_branch
          %297 = sbr.rel (%p295) target = $region40
        $region39: #{diw_data_aug_test_forward.1} parent=31 // pred_region
          %s298 = sand.u32 %s25, 1
          %s299 = scalar_lea.sflag [#allocation9], %s298
          %s300 = sand.u32 %s145, 1
          %s301 = smul.addr %s300, 16
          %s302 = scalar_lea.vmem [#allocation10], %s301
          %s304 = ssub.s32 256, 256
          %305 = vsyncadd %s299, %s304
          %s306 = smul.addr %s25, 2
          %s307 = smul.addr %s306, 128
          %s308 = scalar_lea.hbm %s5, %s307
          %s309 = sshll.u32 %s302, 4
          %s310 = int_to_ptr.vmem [resolvable:$true] %s309
          %315 = dma.hbm_to_vmem [thread:$0]  %s308, 256, %s310, %s299, 128, 128, 8
        $region40: #{diw_data_aug_test_forward.1} parent=31 // pred_fallthru
          _
      $region32: #{diw_data_aug_test_forward.1} parent=5 // pred_fallthru
        _
      %p316 = scmp.le.s32.totalorder 1, %s25
      %p317 = scmp.lt.s32.totalorder %s25, 3
      %p318 = pnand %p316, %p317
      %p319 = pneg %p318
      // Predicated region
      $region41: #{diw_data_aug_test_forward.1} parent=5 // pred_check
        _
      $region42: #{diw_data_aug_test_forward.1} parent=5 // pred_check_branch
        %321 = sbr.rel (%p318) target = $region44
      $region43: #{diw_data_aug_test_forward.1} parent=5 // pred_region
        %s322 = ssub.s32 %s25, 1
        // Predicated region
        $region45: #{diw_data_aug_test_forward.1} parent=43 // pred_check
          %p323 = pneg %p46
        $region46: #{diw_data_aug_test_forward.1} parent=43 // pred_check_branch
          %325 = sbr.rel (%p323) target = $region48
        $region47: #{diw_data_aug_test_forward.1} parent=43 // pred_region
          %326 = dma.done [#allocation3], 4096
        $region48: #{diw_data_aug_test_forward.1} parent=43 // pred_fallthru
          _
        // Predicated region
        $region49: #{diw_data_aug_test_forward.1} parent=43 // pred_check
          %p327 = pneg %p67
        $region50: #{diw_data_aug_test_forward.1} parent=43 // pred_check_branch
          %329 = sbr.rel (%p327) target = $region52
        $region51: #{diw_data_aug_test_forward.1} parent=43 // pred_region
          %330 = dma.done [#allocation6], 512
        $region52: #{diw_data_aug_test_forward.1} parent=43 // pred_fallthru
          _
        // Predicated region
        $region53: #{diw_data_aug_test_forward.1} parent=43 // pred_check
          %p331 = pneg %p88
        $region54: #{diw_data_aug_test_forward.1} parent=43 // pred_check_branch
          %333 = sbr.rel (%p331) target = $region56
        $region55: #{diw_data_aug_test_forward.1} parent=43 // pred_region
          %334 = dma.done [#allocation6], 1024
        $region56: #{diw_data_aug_test_forward.1} parent=43 // pred_fallthru
          _
        %s335 = sand.u32 %s30, 1
        %s336 = scalar_lea.sflag [#allocation9], %s335
        %s337 = sand.u32 %s122, 1
        %s338 = smul.addr %s337, 16
        %s339 = scalar_lea.vmem [#allocation8], %s338
        // Predicated region
        $region57: #{diw_data_aug_test_forward.1} parent=43 // pred_check
          %p340 = pneg %p135
        $region58: #{diw_data_aug_test_forward.1} parent=43 // pred_check_branch
          %342 = sbr.rel (%p340) target = $region60
        $region59: #{diw_data_aug_test_forward.1} parent=43 // pred_region
          %343 = dma.done %s336, 256
        $region60: #{diw_data_aug_test_forward.1} parent=43 // pred_fallthru
          _
        %s344 = sand.u32 %s30, 1
        %s345 = scalar_lea.sflag [#allocation9], %s344
        %s346 = sand.u32 %s148, 1
        %s347 = smul.addr %s346, 16
        %s348 = scalar_lea.vmem [#allocation10], %s347
        // Predicated region
        $region61: #{diw_data_aug_test_forward.1} parent=43 // pred_check
          %p349 = pneg %p161
        $region62: #{diw_data_aug_test_forward.1} parent=43 // pred_check_branch
          %351 = sbr.rel (%p349) target = $region64
        $region63: #{diw_data_aug_test_forward.1} parent=43 // pred_region
          %352 = dma.done %s345, 256
        $region64: #{diw_data_aug_test_forward.1} parent=43 // pred_fallthru
          _
        %p353 = pneg %p46
        %p354 = pneg %p43
        %p355 = pneg %p67
        %p356 = pneg %p64
        %p357 = pneg %p88
        %p358 = pneg %p85
        %p359 = pneg %p109
        %p360 = pneg %p106
        %s361 = sand.u32 %s30, 1
        %s362 = scalar_lea.sflag [#allocation9], %s361
        %s363 = sand.u32 %s122, 1
        %s364 = smul.addr %s363, 16
        %s365 = scalar_lea.vmem [#allocation8], %s364
        %p366 = pneg %p135
        %p367 = pneg %p132
        %s368 = sand.u32 %s30, 1
        %s369 = scalar_lea.sflag [#allocation9], %s368
        %s370 = sand.u32 %s148, 1
        %s371 = smul.addr %s370, 16
        %s372 = scalar_lea.vmem [#allocation10], %s371
        %p373 = pneg %p161
        %p374 = pneg %p158
        %p375 = pneg %p187
        %p376 = pneg %p184
        %s377 = sand.u32 %s174, 1
        %s378 = scalar_lea.sflag [#allocation4], %s377
        %s379 = sand.u32 %s174, 1
        %s380 = smul.addr %s379, 512
        %s381 = scalar_lea.vmem [#allocation11], %s380
        %p382 = pneg %p213
        %p383 = pneg %p210
        %s384 = sand.u32 %s200, 1
        %s385 = scalar_lea.sflag [#allocation13], %s384
        %s386 = sand.u32 %s200, 1
        %s387 = smul.addr %s386, 64
        %s388 = scalar_lea.vmem [#allocation12], %s387
        %v389 = vld [vmem:[%s339] sm:$0xff]
        %v390 = vld [vmem:[%s339 + $0x8] sm:$0xff]
        %v391 = vld [vmem:[%s348] sm:$0xff]
        %v392 = vld [vmem:[%s348 + $0x8] sm:$0xff]
        %v393 = vld [vmem:[#allocation5] sm:$0xff]
        %v394 = vld [vmem:[#allocation5 + $0x8] sm:$0xff]
        %v395 = vld [vmem:[#allocation5 + $0x10] sm:$0xff]
        %v396 = vld [vmem:[#allocation5 + $0x18] sm:$0xff]
        %vm397 = vcmask 130048
        %v399 = vsel %vm397, %v389, 0
        %v402 = vsel %vm397, %v390, 0
        %404 = vmatprep.subr.mxu0 %v394
        %405 = vmatpush1.msra.mxu0 %v393
        %406 = vmatprep.subr.mxu0 %v396
        %407 = vmatpush1.msra.mxu0 %v395
        %408 = vmatprep.subr.mxu0 0.0
        %409 = vmatpush1.msra.mxu0 0.0
        %410 = vmatprep.subr.mxu0 0.0
        %411 = vmatpush1.msra.mxu0 0.0
        %412 = vmatprep.subr.mxu0 0.0
        %413 = vmatpush1.msra.mxu0 0.0
        %414 = vmatprep.subr.mxu0 0.0
        %415 = vmatpush1.msra.mxu0 0.0
        %416 = vmatprep.subr.mxu0 0.0
        %417 = vmatpush1.msra.mxu0 0.0
        %418 = vmatprep.subr.mxu0 0.0
        %419 = vmatpush1.msra.mxu0 0.0
        %420 = vmatprep.subr.mxu0 0.0
        %421 = vmatpush1.msra.mxu0 0.0
        %422 = vmatprep.subr.mxu0 0.0
        %423 = vmatpush1.msra.mxu0 0.0
        %424 = vmatprep.subr.mxu0 0.0
        %425 = vmatpush1.msra.mxu0 0.0
        %426 = vmatprep.subr.mxu0 0.0
        %427 = vmatpush1.msra.mxu0 0.0
        %428 = vmatprep.subr.mxu0 0.0
        %429 = vmatpush1.msra.mxu0 0.0
        %430 = vmatprep.subr.mxu0 0.0
        %431 = vmatpush1.msra.mxu0 0.0
        %432 = vmatprep.subr.mxu0 0.0
        %433 = vmatpush1.msra.mxu0 0.0
        %434 = vmatprep.subr.mxu0 0.0
        %435 = vmatpush1.msra.mxu0 0.0
        %436 = vmatprep.subr.mxu0 0.0
        %437 = vmatpush1.msra.mxu0 0.0
        %438 = vmatprep.subr.mxu0 0.0
        %439 = vmatpush1.msra.mxu0 0.0
        %440 = vmatprep.subr.mxu0 0.0
        %441 = vmatpush1.msra.mxu0 0.0
        %442 = vmatprep.subr.mxu0 0.0
        %443 = vmatpush1.msra.mxu0 0.0
        %444 = vmatprep.subr.mxu0 0.0
        %445 = vmatpush1.msra.mxu0 0.0
        %446 = vmatprep.subr.mxu0 0.0
        %447 = vmatpush1.msra.mxu0 0.0
        %448 = vmatprep.subr.mxu0 0.0
        %449 = vmatpush1.msra.mxu0 0.0
        %450 = vmatprep.subr.mxu0 0.0
        %451 = vmatpush1.msra.mxu0 0.0
        %452 = vmatprep.subr.mxu0 0.0
        %453 = vmatpush1.msra.mxu0 0.0
        %454 = vmatprep.subr.mxu0 0.0
        %455 = vmatpush1.msra.mxu0 0.0
        %456 = vmatprep.subr.mxu0 0.0
        %457 = vmatpush1.msra.mxu0 0.0
        %458 = vmatprep.subr.mxu0 0.0
        %459 = vmatpush1.msra.mxu0 0.0
        %460 = vmatprep.subr.mxu0 0.0
        %461 = vmatpush1.msra.mxu0 0.0
        %462 = vmatprep.subr.mxu0 0.0
        %463 = vmatpush1.msra.mxu0 0.0
        %464 = vmatprep.subr.mxu0 0.0
        %465 = vmatpush1.msra.mxu0 0.0
        %466 = vmatprep.subr.mxu0 0.0
        %467 = vmatpush1.msra.mxu0 0.0
        %468 = vmatprep.mubr.f32.mxu0 0.0
        %469 = vmatmul.mubr.f32.gmra.mrb[0].mxu0 %v399
        %v470 = vpop.f32.mrb[0].mxu0
        %v471 = vadd.f32 0.0, %v470
        %v472 = vpop.f32.mrb[0].mxu0
        %v473 = vadd.f32 0.0, %v472
        %474 = vmatprep.mubr.f32.mxu0 0.0
        %475 = vmatmul.mubr.f32.gmra.mrb[0].mxu0 %v402
        %v476 = vpop.f32.mrb[0].mxu0
        %v477 = vadd.f32 0.0, %v476
        %v478 = vpop.f32.mrb[0].mxu0
        %v479 = vadd.f32 0.0, %v478
        %480 = vdwg.mxu0
        %v481 = vld [vmem:[%s3] sm:$0xff]
        %v482 = vld [vmem:[%s3 + $0x8] sm:$0xff]
        %v484 = vsel %vm397, %v391, 0
        %v487 = vsel %vm397, %v392, 0
        %489 = vmatprep.subr.mxu0 0.0
        %490 = vmatpush1.msra.mxu0 %v481
        %491 = vmatprep.subr.mxu0 0.0
        %492 = vmatpush1.msra.mxu0 %v482
        %493 = vmatprep.subr.mxu0 0.0
        %494 = vmatpush1.msra.mxu0 0.0
        %495 = vmatprep.subr.mxu0 0.0
        %496 = vmatpush1.msra.mxu0 0.0
        %497 = vmatprep.subr.mxu0 0.0
        %498 = vmatpush1.msra.mxu0 0.0
        %499 = vmatprep.subr.mxu0 0.0
        %500 = vmatpush1.msra.mxu0 0.0
        %501 = vmatprep.subr.mxu0 0.0
        %502 = vmatpush1.msra.mxu0 0.0
        %503 = vmatprep.subr.mxu0 0.0
        %504 = vmatpush1.msra.mxu0 0.0
        %505 = vmatprep.subr.mxu0 0.0
        %506 = vmatpush1.msra.mxu0 0.0
        %507 = vmatprep.subr.mxu0 0.0
        %508 = vmatpush1.msra.mxu0 0.0
        %509 = vmatprep.subr.mxu0 0.0
        %510 = vmatpush1.msra.mxu0 0.0
        %511 = vmatprep.subr.mxu0 0.0
        %512 = vmatpush1.msra.mxu0 0.0
        %513 = vmatprep.subr.mxu0 0.0
        %514 = vmatpush1.msra.mxu0 0.0
        %515 = vmatprep.subr.mxu0 0.0
        %516 = vmatpush1.msra.mxu0 0.0
        %517 = vmatprep.subr.mxu0 0.0
        %518 = vmatpush1.msra.mxu0 0.0
        %519 = vmatprep.subr.mxu0 0.0
        %520 = vmatpush1.msra.mxu0 0.0
        %521 = vmatprep.subr.mxu0 0.0
        %522 = vmatpush1.msra.mxu0 0.0
        %523 = vmatprep.subr.mxu0 0.0
        %524 = vmatpush1.msra.mxu0 0.0
        %525 = vmatprep.subr.mxu0 0.0
        %526 = vmatpush1.msra.mxu0 0.0
        %527 = vmatprep.subr.mxu0 0.0
        %528 = vmatpush1.msra.mxu0 0.0
        %529 = vmatprep.subr.mxu0 0.0
        %530 = vmatpush1.msra.mxu0 0.0
        %531 = vmatprep.subr.mxu0 0.0
        %532 = vmatpush1.msra.mxu0 0.0
        %533 = vmatprep.subr.mxu0 0.0
        %534 = vmatpush1.msra.mxu0 0.0
        %535 = vmatprep.subr.mxu0 0.0
        %536 = vmatpush1.msra.mxu0 0.0
        %537 = vmatprep.subr.mxu0 0.0
        %538 = vmatpush1.msra.mxu0 0.0
        %539 = vmatprep.subr.mxu0 0.0
        %540 = vmatpush1.msra.mxu0 0.0
        %541 = vmatprep.subr.mxu0 0.0
        %542 = vmatpush1.msra.mxu0 0.0
        %543 = vmatprep.subr.mxu0 0.0
        %544 = vmatpush1.msra.mxu0 0.0
        %545 = vmatprep.subr.mxu0 0.0
        %546 = vmatpush1.msra.mxu0 0.0
        %547 = vmatprep.subr.mxu0 0.0
        %548 = vmatpush1.msra.mxu0 0.0
        %549 = vmatprep.subr.mxu0 0.0
        %550 = vmatpush1.msra.mxu0 0.0
        %551 = vmatprep.subr.mxu0 0.0
        %552 = vmatpush1.msra.mxu0 0.0
        %553 = vmatprep.mubr.f32.mxu0 0.0
        %554 = vmatmul.mubr.f32.gmra.mrb[0].mxu0 %v484
        %v555 = vpop.f32.mrb[0].mxu0
        %v556 = vadd.f32 0.0, %v555
        %v557 = vpop.f32.mrb[0].mxu0
        %558 = vmatprep.mubr.f32.mxu0 0.0
        %559 = vmatmul.mubr.f32.gmra.mrb[0].mxu0 %v487
        %v560 = vpop.f32.mrb[0].mxu0
        %v561 = vadd.f32 0.0, %v560
        %v562 = vpop.f32.mrb[0].mxu0
        %563 = vdwg.mxu0
        %v564 = vld [vmem:[#allocation2] sm:$0xff]
        %v565 = vld [vmem:[#allocation2 + $0x8] sm:$0xff]
        %v566 = vld [vmem:[#allocation2 + $0x10] sm:$0xff]
        %v567 = vld [vmem:[#allocation2 + $0x18] sm:$0xff]
        %v568 = vld [vmem:[#allocation2 + $0x20] sm:$0xff]
        %v569 = vld [vmem:[#allocation2 + $0x28] sm:$0xff]
        %v570 = vld [vmem:[#allocation2 + $0x30] sm:$0xff]
        %v571 = vld [vmem:[#allocation2 + $0x38] sm:$0xff]
        %v572 = vld [vmem:[#allocation2 + $0x40] sm:$0xff]
        %v573 = vld [vmem:[#allocation2 + $0x48] sm:$0xff]
        %v574 = vld [vmem:[#allocation2 + $0x50] sm:$0xff]
        %v575 = vld [vmem:[#allocation2 + $0x58] sm:$0xff]
        %v576 = vld [vmem:[#allocation2 + $0x60] sm:$0xff]
        %v577 = vld [vmem:[#allocation2 + $0x68] sm:$0xff]
        %v578 = vld [vmem:[#allocation2 + $0x70] sm:$0xff]
        %v579 = vld [vmem:[#allocation2 + $0x78] sm:$0xff]
        %v580 = vld [vmem:[#allocation2 + $0x80] sm:$0xff]
        %v581 = vld [vmem:[#allocation2 + $0x88] sm:$0xff]
        %v582 = vld [vmem:[#allocation2 + $0x90] sm:$0xff]
        %v583 = vld [vmem:[#allocation2 + $0x98] sm:$0xff]
        %v584 = vld [vmem:[#allocation2 + $0xa0] sm:$0xff]
        %v585 = vld [vmem:[#allocation2 + $0xa8] sm:$0xff]
        %v586 = vld [vmem:[#allocation2 + $0xb0] sm:$0xff]
        %v587 = vld [vmem:[#allocation2 + $0xb8] sm:$0xff]
        %v588 = vld [vmem:[#allocation2 + $0xc0] sm:$0xff]
        %v589 = vld [vmem:[#allocation2 + $0xc8] sm:$0xff]
        %v590 = vld [vmem:[#allocation2 + $0xd0] sm:$0xff]
        %v591 = vld [vmem:[#allocation2 + $0xd8] sm:$0xff]
        %v592 = vld [vmem:[#allocation2 + $0xe0] sm:$0xff]
        %v593 = vld [vmem:[#allocation2 + $0xe8] sm:$0xff]
        %v594 = vld [vmem:[#allocation2 + $0xf0] sm:$0xff]
        %v595 = vld [vmem:[#allocation2 + $0xf8] sm:$0xff]
        %v597 = vsel %vm397, %v564, 0
        %v600 = vsel %vm397, %v565, 0
        %v603 = vsel %vm397, %v566, 0
        %v606 = vsel %vm397, %v567, 0
        %v609 = vsel %vm397, %v568, 0
        %v612 = vsel %vm397, %v569, 0
        %v615 = vsel %vm397, %v570, 0
        %v618 = vsel %vm397, %v571, 0
        %v621 = vsel %vm397, %v572, 0
        %v624 = vsel %vm397, %v573, 0
        %v627 = vsel %vm397, %v574, 0
        %v630 = vsel %vm397, %v575, 0
        %v633 = vsel %vm397, %v576, 0
        %v636 = vsel %vm397, %v577, 0
        %v639 = vsel %vm397, %v578, 0
        %v642 = vsel %vm397, %v579, 0
        %v645 = vsel %vm397, %v580, 0
        %v648 = vsel %vm397, %v581, 0
        %v651 = vsel %vm397, %v582, 0
        %v654 = vsel %vm397, %v583, 0
        %v657 = vsel %vm397, %v584, 0
        %v660 = vsel %vm397, %v585, 0
        %v663 = vsel %vm397, %v586, 0
        %v666 = vsel %vm397, %v587, 0
        %v669 = vsel %vm397, %v588, 0
        %v672 = vsel %vm397, %v589, 0
        %v675 = vsel %vm397, %v590, 0
        %v678 = vsel %vm397, %v591, 0
        %v681 = vsel %vm397, %v592, 0
        %v684 = vsel %vm397, %v593, 0
        %v687 = vsel %vm397, %v594, 0
        %v690 = vsel %vm397, %v595, 0
        %692 = vmatprep.subr.mxu0 %v473
        %693 = vmatpush1.msra.mxu0 %v471
        %694 = vmatprep.subr.mxu0 %v479
        %695 = vmatpush1.msra.mxu0 %v477
        %696 = vmatprep.subr.mxu0 0.0
        %697 = vmatpush1.msra.mxu0 0.0
        %698 = vmatprep.subr.mxu0 0.0
        %699 = vmatpush1.msra.mxu0 0.0
        %700 = vmatprep.subr.mxu0 0.0
        %701 = vmatpush1.msra.mxu0 0.0
        %702 = vmatprep.subr.mxu0 0.0
        %703 = vmatpush1.msra.mxu0 0.0
        %704 = vmatprep.subr.mxu0 0.0
        %705 = vmatpush1.msra.mxu0 0.0
        %706 = vmatprep.subr.mxu0 0.0
        %707 = vmatpush1.msra.mxu0 0.0
        %708 = vmatprep.subr.mxu0 0.0
        %709 = vmatpush1.msra.mxu0 0.0
        %710 = vmatprep.subr.mxu0 0.0
        %711 = vmatpush1.msra.mxu0 0.0
        %712 = vmatprep.subr.mxu0 0.0
        %713 = vmatpush1.msra.mxu0 0.0
        %714 = vmatprep.subr.mxu0 0.0
        %715 = vmatpush1.msra.mxu0 0.0
        %716 = vmatprep.subr.mxu0 0.0
        %717 = vmatpush1.msra.mxu0 0.0
        %718 = vmatprep.subr.mxu0 0.0
        %719 = vmatpush1.msra.mxu0 0.0
        %720 = vmatprep.subr.mxu0 0.0
        %721 = vmatpush1.msra.mxu0 0.0
        %722 = vmatprep.subr.mxu0 0.0
        %723 = vmatpush1.msra.mxu0 0.0
        %724 = vmatprep.subr.mxu0 0.0
        %725 = vmatpush1.msra.mxu0 0.0
        %726 = vmatprep.subr.mxu0 0.0
        %727 = vmatpush1.msra.mxu0 0.0
        %728 = vmatprep.subr.mxu0 0.0
        %729 = vmatpush1.msra.mxu0 0.0
        %730 = vmatprep.subr.mxu0 0.0
        %731 = vmatpush1.msra.mxu0 0.0
        %732 = vmatprep.subr.mxu0 0.0
        %733 = vmatpush1.msra.mxu0 0.0
        %734 = vmatprep.subr.mxu0 0.0
        %735 = vmatpush1.msra.mxu0 0.0
        %736 = vmatprep.subr.mxu0 0.0
        %737 = vmatpush1.msra.mxu0 0.0
        %738 = vmatprep.subr.mxu0 0.0
        %739 = vmatpush1.msra.mxu0 0.0
        %740 = vmatprep.subr.mxu0 0.0
        %741 = vmatpush1.msra.mxu0 0.0
        %742 = vmatprep.subr.mxu0 0.0
        %743 = vmatpush1.msra.mxu0 0.0
        %744 = vmatprep.subr.mxu0 0.0
        %745 = vmatpush1.msra.mxu0 0.0
        %746 = vmatprep.subr.mxu0 0.0
        %747 = vmatpush1.msra.mxu0 0.0
        %748 = vmatprep.subr.mxu0 0.0
        %749 = vmatpush1.msra.mxu0 0.0
        %750 = vmatprep.subr.mxu0 0.0
        %751 = vmatpush1.msra.mxu0 0.0
        %752 = vmatprep.subr.mxu0 0.0
        %753 = vmatpush1.msra.mxu0 0.0
        %754 = vmatprep.subr.mxu0 0.0
        %755 = vmatpush1.msra.mxu0 0.0
        %756 = vmatprep.mubr.f32.mxu0 0.0
        %757 = vmatmul.mubr.f32.gmra.mrb[0].mxu0 %v597
        %v758 = vpop.f32.mrb[0].mxu0
        %v759 = vadd.f32 0.0, %v758
        %v760 = vpop.f32.mrb[0].mxu0
        %v761 = vadd.f32 0.0, %v760
        %762 = vmatprep.mubr.f32.mxu0 0.0
        %763 = vmatmul.mubr.f32.gmra.mrb[0].mxu0 %v600
        %v764 = vpop.f32.mrb[0].mxu0
        %v765 = vadd.f32 0.0, %v764
        %v766 = vpop.f32.mrb[0].mxu0
        %v767 = vadd.f32 0.0, %v766
        %768 = vmatprep.mubr.f32.mxu0 0.0
        %769 = vmatmul.mubr.f32.gmra.mrb[0].mxu0 %v603
        %v770 = vpop.f32.mrb[0].mxu0
        %v771 = vadd.f32 0.0, %v770
        %v772 = vpop.f32.mrb[0].mxu0
        %v773 = vadd.f32 0.0, %v772
        %774 = vmatprep.mubr.f32.mxu0 0.0
        %775 = vmatmul.mubr.f32.gmra.mrb[0].mxu0 %v606
        %v776 = vpop.f32.mrb[0].mxu0
        %v777 = vadd.f32 0.0, %v776
        %v778 = vpop.f32.mrb[0].mxu0
        %v779 = vadd.f32 0.0, %v778
        %780 = vmatprep.mubr.f32.mxu0 0.0
        %781 = vmatmul.mubr.f32.gmra.mrb[0].mxu0 %v609
        %v782 = vpop.f32.mrb[0].mxu0
        %v783 = vadd.f32 0.0, %v782
        %v784 = vpop.f32.mrb[0].mxu0
        %v785 = vadd.f32 0.0, %v784
        %786 = vmatprep.mubr.f32.mxu0 0.0
        %787 = vmatmul.mubr.f32.gmra.mrb[0].mxu0 %v612
        %v788 = vpop.f32.mrb[0].mxu0
        %v789 = vadd.f32 0.0, %v788
        %v790 = vpop.f32.mrb[0].mxu0
        %v791 = vadd.f32 0.0, %v790
        %792 = vmatprep.mubr.f32.mxu0 0.0
        %793 = vmatmul.mubr.f32.gmra.mrb[0].mxu0 %v615
        %v794 = vpop.f32.mrb[0].mxu0
        %v795 = vadd.f32 0.0, %v794
        %v796 = vpop.f32.mrb[0].mxu0
        %v797 = vadd.f32 0.0, %v796
        %798 = vmatprep.mubr.f32.mxu0 0.0
        %799 = vmatmul.mubr.f32.gmra.mrb[0].mxu0 %v618
        %v800 = vpop.f32.mrb[0].mxu0
        %v801 = vadd.f32 0.0, %v800
        %v802 = vpop.f32.mrb[0].mxu0
        %v803 = vadd.f32 0.0, %v802
        %804 = vmatprep.mubr.f32.mxu0 0.0
        %805 = vmatmul.mubr.f32.gmra.mrb[0].mxu0 %v621
        %v806 = vpop.f32.mrb[0].mxu0
        %v807 = vadd.f32 0.0, %v806
        %v808 = vpop.f32.mrb[0].mxu0
        %v809 = vadd.f32 0.0, %v808
        %810 = vmatprep.mubr.f32.mxu0 0.0
        %811 = vmatmul.mubr.f32.gmra.mrb[0].mxu0 %v624
        %v812 = vpop.f32.mrb[0].mxu0
        %v813 = vadd.f32 0.0, %v812
        %v814 = vpop.f32.mrb[0].mxu0
        %v815 = vadd.f32 0.0, %v814
        %816 = vmatprep.mubr.f32.mxu0 0.0
        %817 = vmatmul.mubr.f32.gmra.mrb[0].mxu0 %v627
        %v818 = vpop.f32.mrb[0].mxu0
        %v819 = vadd.f32 0.0, %v818
        %v820 = vpop.f32.mrb[0].mxu0
        %v821 = vadd.f32 0.0, %v820
        %822 = vmatprep.mubr.f32.mxu0 0.0
        %823 = vmatmul.mubr.f32.gmra.mrb[0].mxu0 %v630
        %v824 = vpop.f32.mrb[0].mxu0
        %v825 = vadd.f32 0.0, %v824
        %v826 = vpop.f32.mrb[0].mxu0
        %v827 = vadd.f32 0.0, %v826
        %828 = vmatprep.mubr.f32.mxu0 0.0
        %829 = vmatmul.mubr.f32.gmra.mrb[0].mxu0 %v633
        %v830 = vpop.f32.mrb[0].mxu0
        %v831 = vadd.f32 0.0, %v830
        %v832 = vpop.f32.mrb[0].mxu0
        %v833 = vadd.f32 0.0, %v832
        %834 = vmatprep.mubr.f32.mxu0 0.0
        %835 = vmatmul.mubr.f32.gmra.mrb[0].mxu0 %v636
        %v836 = vpop.f32.mrb[0].mxu0
        %v837 = vadd.f32 0.0, %v836
        %v838 = vpop.f32.mrb[0].mxu0
        %v839 = vadd.f32 0.0, %v838
        %840 = vmatprep.mubr.f32.mxu0 0.0
        %841 = vmatmul.mubr.f32.gmra.mrb[0].mxu0 %v639
        %v842 = vpop.f32.mrb[0].mxu0
        %v843 = vadd.f32 0.0, %v842
        %v844 = vpop.f32.mrb[0].mxu0
        %v845 = vadd.f32 0.0, %v844
        %846 = vmatprep.mubr.f32.mxu0 0.0
        %847 = vmatmul.mubr.f32.gmra.mrb[0].mxu0 %v642
        %v848 = vpop.f32.mrb[0].mxu0
        %v849 = vadd.f32 0.0, %v848
        %v850 = vpop.f32.mrb[0].mxu0
        %v851 = vadd.f32 0.0, %v850
        %852 = vmatprep.mubr.f32.mxu0 0.0
        %853 = vmatmul.mubr.f32.gmra.mrb[0].mxu0 %v645
        %v854 = vpop.f32.mrb[0].mxu0
        %v855 = vadd.f32 0.0, %v854
        %v856 = vpop.f32.mrb[0].mxu0
        %v857 = vadd.f32 0.0, %v856
        %858 = vmatprep.mubr.f32.mxu0 0.0
        %859 = vmatmul.mubr.f32.gmra.mrb[0].mxu0 %v648
        %v860 = vpop.f32.mrb[0].mxu0
        %v861 = vadd.f32 0.0, %v860
        %v862 = vpop.f32.mrb[0].mxu0
        %v863 = vadd.f32 0.0, %v862
        %864 = vmatprep.mubr.f32.mxu0 0.0
        %865 = vmatmul.mubr.f32.gmra.mrb[0].mxu0 %v651
        %v866 = vpop.f32.mrb[0].mxu0
        %v867 = vadd.f32 0.0, %v866
        %v868 = vpop.f32.mrb[0].mxu0
        %v869 = vadd.f32 0.0, %v868
        %870 = vmatprep.mubr.f32.mxu0 0.0
        %871 = vmatmul.mubr.f32.gmra.mrb[0].mxu0 %v654
        %v872 = vpop.f32.mrb[0].mxu0
        %v873 = vadd.f32 0.0, %v872
        %v874 = vpop.f32.mrb[0].mxu0
        %v875 = vadd.f32 0.0, %v874
        %876 = vmatprep.mubr.f32.mxu0 0.0
        %877 = vmatmul.mubr.f32.gmra.mrb[0].mxu0 %v657
        %v878 = vpop.f32.mrb[0].mxu0
        %v879 = vadd.f32 0.0, %v878
        %v880 = vpop.f32.mrb[0].mxu0
        %v881 = vadd.f32 0.0, %v880
        %882 = vmatprep.mubr.f32.mxu0 0.0
        %883 = vmatmul.mubr.f32.gmra.mrb[0].mxu0 %v660
        %v884 = vpop.f32.mrb[0].mxu0
        %v885 = vadd.f32 0.0, %v884
        %v886 = vpop.f32.mrb[0].mxu0
        %v887 = vadd.f32 0.0, %v886
        %888 = vmatprep.mubr.f32.mxu0 0.0
        %889 = vmatmul.mubr.f32.gmra.mrb[0].mxu0 %v663
        %v890 = vpop.f32.mrb[0].mxu0
        %v891 = vadd.f32 0.0, %v890
        %v892 = vpop.f32.mrb[0].mxu0
        %v893 = vadd.f32 0.0, %v892
        %894 = vmatprep.mubr.f32.mxu0 0.0
        %895 = vmatmul.mubr.f32.gmra.mrb[0].mxu0 %v666
        %v896 = vpop.f32.mrb[0].mxu0
        %v897 = vadd.f32 0.0, %v896
        %v898 = vpop.f32.mrb[0].mxu0
        %v899 = vadd.f32 0.0, %v898
        %900 = vmatprep.mubr.f32.mxu0 0.0
        %901 = vmatmul.mubr.f32.gmra.mrb[0].mxu0 %v669
        %v902 = vpop.f32.mrb[0].mxu0
        %v903 = vadd.f32 0.0, %v902
        %v904 = vpop.f32.mrb[0].mxu0
        %v905 = vadd.f32 0.0, %v904
        %906 = vmatprep.mubr.f32.mxu0 0.0
        %907 = vmatmul.mubr.f32.gmra.mrb[0].mxu0 %v672
        %v908 = vpop.f32.mrb[0].mxu0
        %v909 = vadd.f32 0.0, %v908
        %v910 = vpop.f32.mrb[0].mxu0
        %v911 = vadd.f32 0.0, %v910
        %912 = vmatprep.mubr.f32.mxu0 0.0
        %913 = vmatmul.mubr.f32.gmra.mrb[0].mxu0 %v675
        %v914 = vpop.f32.mrb[0].mxu0
        %v915 = vadd.f32 0.0, %v914
        %v916 = vpop.f32.mrb[0].mxu0
        %v917 = vadd.f32 0.0, %v916
        %918 = vmatprep.mubr.f32.mxu0 0.0
        %919 = vmatmul.mubr.f32.gmra.mrb[0].mxu0 %v678
        %v920 = vpop.f32.mrb[0].mxu0
        %v921 = vadd.f32 0.0, %v920
        %v922 = vpop.f32.mrb[0].mxu0
        %v923 = vadd.f32 0.0, %v922
        %924 = vmatprep.mubr.f32.mxu0 0.0
        %925 = vmatmul.mubr.f32.gmra.mrb[0].mxu0 %v681
        %v926 = vpop.f32.mrb[0].mxu0
        %v927 = vadd.f32 0.0, %v926
        %v928 = vpop.f32.mrb[0].mxu0
        %v929 = vadd.f32 0.0, %v928
        %930 = vmatprep.mubr.f32.mxu0 0.0
        %931 = vmatmul.mubr.f32.gmra.mrb[0].mxu0 %v684
        %v932 = vpop.f32.mrb[0].mxu0
        %v933 = vadd.f32 0.0, %v932
        %v934 = vpop.f32.mrb[0].mxu0
        %v935 = vadd.f32 0.0, %v934
        %936 = vmatprep.mubr.f32.mxu0 0.0
        %937 = vmatmul.mubr.f32.gmra.mrb[0].mxu0 %v687
        %v938 = vpop.f32.mrb[0].mxu0
        %v939 = vadd.f32 0.0, %v938
        %v940 = vpop.f32.mrb[0].mxu0
        %v941 = vadd.f32 0.0, %v940
        %942 = vmatprep.mubr.f32.mxu0 0.0
        %943 = vmatmul.mubr.f32.gmra.mrb[0].mxu0 %v690
        %v944 = vpop.f32.mrb[0].mxu0
        %v945 = vadd.f32 0.0, %v944
        %v946 = vpop.f32.mrb[0].mxu0
        %v947 = vadd.f32 0.0, %v946
        %948 = vdwg.mxu0
        %v949 = vld [vmem:[#allocation7] sm:$0xff]
        %v950 = vld [vmem:[#allocation7 + $0x8] sm:$0xff]
        %v951 = vld [vmem:[#allocation7 + $0x10] sm:$0xff]
        %v952 = vld [vmem:[#allocation7 + $0x18] sm:$0xff]
        %v953 = vld [vmem:[#allocation7 + $0x20] sm:$0xff]
        %v954 = vld [vmem:[#allocation7 + $0x28] sm:$0xff]
        %v955 = vld [vmem:[#allocation7 + $0x30] sm:$0xff]
        %v956 = vld [vmem:[#allocation7 + $0x38] sm:$0xff]
        %v958 = vsel %vm397, %v949, 0
        %v961 = vsel %vm397, %v950, 0
        %v964 = vsel %vm397, %v951, 0
        %v967 = vsel %vm397, %v952, 0
        %v970 = vsel %vm397, %v953, 0
        %v973 = vsel %vm397, %v954, 0
        %v976 = vsel %vm397, %v955, 0
        %v979 = vsel %vm397, %v956, 0
        %981 = vmatprep.subr.mxu0 0.0
        %982 = vmatpush1.msra.mxu0 %v556
        %983 = vmatprep.subr.mxu0 0.0
        %984 = vmatpush1.msra.mxu0 %v561
        %985 = vmatprep.subr.mxu0 0.0
        %986 = vmatpush1.msra.mxu0 0.0
        %987 = vmatprep.subr.mxu0 0.0
        %988 = vmatpush1.msra.mxu0 0.0
        %989 = vmatprep.subr.mxu0 0.0
        %990 = vmatpush1.msra.mxu0 0.0
        %991 = vmatprep.subr.mxu0 0.0
        %992 = vmatpush1.msra.mxu0 0.0
        %993 = vmatprep.subr.mxu0 0.0
        %994 = vmatpush1.msra.mxu0 0.0
        %995 = vmatprep.subr.mxu0 0.0
        %996 = vmatpush1.msra.mxu0 0.0
        %997 = vmatprep.subr.mxu0 0.0
        %998 = vmatpush1.msra.mxu0 0.0
        %999 = vmatprep.subr.mxu0 0.0
        %1000 = vmatpush1.msra.mxu0 0.0
        %1001 = vmatprep.subr.mxu0 0.0
        %1002 = vmatpush1.msra.mxu0 0.0
        %1003 = vmatprep.subr.mxu0 0.0
        %1004 = vmatpush1.msra.mxu0 0.0
        %1005 = vmatprep.subr.mxu0 0.0
        %1006 = vmatpush1.msra.mxu0 0.0
        %1007 = vmatprep.subr.mxu0 0.0
        %1008 = vmatpush1.msra.mxu0 0.0
        %1009 = vmatprep.subr.mxu0 0.0
        %1010 = vmatpush1.msra.mxu0 0.0
        %1011 = vmatprep.subr.mxu0 0.0
        %1012 = vmatpush1.msra.mxu0 0.0
        %1013 = vmatprep.subr.mxu0 0.0
        %1014 = vmatpush1.msra.mxu0 0.0
        %1015 = vmatprep.subr.mxu0 0.0
        %1016 = vmatpush1.msra.mxu0 0.0
        %1017 = vmatprep.subr.mxu0 0.0
        %1018 = vmatpush1.msra.mxu0 0.0
        %1019 = vmatprep.subr.mxu0 0.0
        %1020 = vmatpush1.msra.mxu0 0.0
        %1021 = vmatprep.subr.mxu0 0.0
        %1022 = vmatpush1.msra.mxu0 0.0
        %1023 = vmatprep.subr.mxu0 0.0
        %1024 = vmatpush1.msra.mxu0 0.0
        %1025 = vmatprep.subr.mxu0 0.0
        %1026 = vmatpush1.msra.mxu0 0.0
        %1027 = vmatprep.subr.mxu0 0.0
        %1028 = vmatpush1.msra.mxu0 0.0
        %1029 = vmatprep.subr.mxu0 0.0
        %1030 = vmatpush1.msra.mxu0 0.0
        %1031 = vmatprep.subr.mxu0 0.0
        %1032 = vmatpush1.msra.mxu0 0.0
        %1033 = vmatprep.subr.mxu0 0.0
        %1034 = vmatpush1.msra.mxu0 0.0
        %1035 = vmatprep.subr.mxu0 0.0
        %1036 = vmatpush1.msra.mxu0 0.0
        %1037 = vmatprep.subr.mxu0 0.0
        %1038 = vmatpush1.msra.mxu0 0.0
        %1039 = vmatprep.subr.mxu0 0.0
        %1040 = vmatpush1.msra.mxu0 0.0
        %1041 = vmatprep.subr.mxu0 0.0
        %1042 = vmatpush1.msra.mxu0 0.0
        %1043 = vmatprep.subr.mxu0 0.0
        %1044 = vmatpush1.msra.mxu0 0.0
        %1045 = vmatprep.mubr.f32.mxu0 0.0
        %1046 = vmatmul.mubr.f32.gmra.mrb[0].mxu0 %v958
        %v1047 = vpop.f32.mrb[0].mxu0
        %v1048 = vadd.f32 0.0, %v1047
        %v1049 = vpop.f32.mrb[0].mxu0
        %1050 = vmatprep.mubr.f32.mxu0 0.0
        %1051 = vmatmul.mubr.f32.gmra.mrb[0].mxu0 %v961
        %v1052 = vpop.f32.mrb[0].mxu0
        %v1053 = vadd.f32 0.0, %v1052
        %v1054 = vpop.f32.mrb[0].mxu0
        %1055 = vmatprep.mubr.f32.mxu0 0.0
        %1056 = vmatmul.mubr.f32.gmra.mrb[0].mxu0 %v964
        %v1057 = vpop.f32.mrb[0].mxu0
        %v1058 = vadd.f32 0.0, %v1057
        %v1059 = vpop.f32.mrb[0].mxu0
        %1060 = vmatprep.mubr.f32.mxu0 0.0
        %1061 = vmatmul.mubr.f32.gmra.mrb[0].mxu0 %v967
        %v1062 = vpop.f32.mrb[0].mxu0
        %v1063 = vadd.f32 0.0, %v1062
        %v1064 = vpop.f32.mrb[0].mxu0
        %1065 = vmatprep.mubr.f32.mxu0 0.0
        %1066 = vmatmul.mubr.f32.gmra.mrb[0].mxu0 %v970
        %v1067 = vpop.f32.mrb[0].mxu0
        %v1068 = vadd.f32 0.0, %v1067
        %v1069 = vpop.f32.mrb[0].mxu0
        %1070 = vmatprep.mubr.f32.mxu0 0.0
        %1071 = vmatmul.mubr.f32.gmra.mrb[0].mxu0 %v973
        %v1072 = vpop.f32.mrb[0].mxu0
        %v1073 = vadd.f32 0.0, %v1072
        %v1074 = vpop.f32.mrb[0].mxu0
        %1075 = vmatprep.mubr.f32.mxu0 0.0
        %1076 = vmatmul.mubr.f32.gmra.mrb[0].mxu0 %v976
        %v1077 = vpop.f32.mrb[0].mxu0
        %v1078 = vadd.f32 0.0, %v1077
        %v1079 = vpop.f32.mrb[0].mxu0
        %1080 = vmatprep.mubr.f32.mxu0 0.0
        %1081 = vmatmul.mubr.f32.gmra.mrb[0].mxu0 %v979
        %v1082 = vpop.f32.mrb[0].mxu0
        %v1083 = vadd.f32 0.0, %v1082
        %v1084 = vpop.f32.mrb[0].mxu0
        %1085 = vdwg.mxu0
        %1086 = vst [vmem:[%s381] sm:$0xff] %v759
        %1087 = vst [vmem:[%s381 + $0x8] sm:$0xff] %v761
        %1088 = vst [vmem:[%s381 + $0x10] sm:$0xff] %v765
        %1089 = vst [vmem:[%s381 + $0x18] sm:$0xff] %v767
        %1090 = vst [vmem:[%s381 + $0x20] sm:$0xff] %v771
        %1091 = vst [vmem:[%s381 + $0x28] sm:$0xff] %v773
        %1092 = vst [vmem:[%s381 + $0x30] sm:$0xff] %v777
        %1093 = vst [vmem:[%s381 + $0x38] sm:$0xff] %v779
        %1094 = vst [vmem:[%s381 + $0x40] sm:$0xff] %v783
        %1095 = vst [vmem:[%s381 + $0x48] sm:$0xff] %v785
        %1096 = vst [vmem:[%s381 + $0x50] sm:$0xff] %v789
        %1097 = vst [vmem:[%s381 + $0x58] sm:$0xff] %v791
        %1098 = vst [vmem:[%s381 + $0x60] sm:$0xff] %v795
        %1099 = vst [vmem:[%s381 + $0x68] sm:$0xff] %v797
        %1100 = vst [vmem:[%s381 + $0x70] sm:$0xff] %v801
        %1101 = vst [vmem:[%s381 + $0x78] sm:$0xff] %v803
        %1102 = vst [vmem:[%s381 + $0x80] sm:$0xff] %v807
        %1103 = vst [vmem:[%s381 + $0x88] sm:$0xff] %v809
        %1104 = vst [vmem:[%s381 + $0x90] sm:$0xff] %v813
        %1105 = vst [vmem:[%s381 + $0x98] sm:$0xff] %v815
        %1106 = vst [vmem:[%s381 + $0xa0] sm:$0xff] %v819
        %1107 = vst [vmem:[%s381 + $0xa8] sm:$0xff] %v821
        %1108 = vst [vmem:[%s381 + $0xb0] sm:$0xff] %v825
        %1109 = vst [vmem:[%s381 + $0xb8] sm:$0xff] %v827
        %1110 = vst [vmem:[%s381 + $0xc0] sm:$0xff] %v831
        %1111 = vst [vmem:[%s381 + $0xc8] sm:$0xff] %v833
        %1112 = vst [vmem:[%s381 + $0xd0] sm:$0xff] %v837
        %1113 = vst [vmem:[%s381 + $0xd8] sm:$0xff] %v839
        %1114 = vst [vmem:[%s381 + $0xe0] sm:$0xff] %v843
        %1115 = vst [vmem:[%s381 + $0xe8] sm:$0xff] %v845
        %1116 = vst [vmem:[%s381 + $0xf0] sm:$0xff] %v849
        %1117 = vst [vmem:[%s381 + $0xf8] sm:$0xff] %v851
        %1118 = vst [vmem:[%s381 + $0x100] sm:$0xff] %v855
        %1119 = vst [vmem:[%s381 + $0x108] sm:$0xff] %v857
        %1120 = vst [vmem:[%s381 + $0x110] sm:$0xff] %v861
        %1121 = vst [vmem:[%s381 + $0x118] sm:$0xff] %v863
        %1122 = vst [vmem:[%s381 + $0x120] sm:$0xff] %v867
        %1123 = vst [vmem:[%s381 + $0x128] sm:$0xff] %v869
        %1124 = vst [vmem:[%s381 + $0x130] sm:$0xff] %v873
        %1125 = vst [vmem:[%s381 + $0x138] sm:$0xff] %v875
        %1126 = vst [vmem:[%s381 + $0x140] sm:$0xff] %v879
        %1127 = vst [vmem:[%s381 + $0x148] sm:$0xff] %v881
        %1128 = vst [vmem:[%s381 + $0x150] sm:$0xff] %v885
        %1129 = vst [vmem:[%s381 + $0x158] sm:$0xff] %v887
        %1130 = vst [vmem:[%s381 + $0x160] sm:$0xff] %v891
        %1131 = vst [vmem:[%s381 + $0x168] sm:$0xff] %v893
        %1132 = vst [vmem:[%s381 + $0x170] sm:$0xff] %v897
        %1133 = vst [vmem:[%s381 + $0x178] sm:$0xff] %v899
        %1134 = vst [vmem:[%s381 + $0x180] sm:$0xff] %v903
        %1135 = vst [vmem:[%s381 + $0x188] sm:$0xff] %v905
        %1136 = vst [vmem:[%s381 + $0x190] sm:$0xff] %v909
        %1137 = vst [vmem:[%s381 + $0x198] sm:$0xff] %v911
        %1138 = vst [vmem:[%s381 + $0x1a0] sm:$0xff] %v915
        %1139 = vst [vmem:[%s381 + $0x1a8] sm:$0xff] %v917
        %1140 = vst [vmem:[%s381 + $0x1b0] sm:$0xff] %v921
        %1141 = vst [vmem:[%s381 + $0x1b8] sm:$0xff] %v923
        %1142 = vst [vmem:[%s381 + $0x1c0] sm:$0xff] %v927
        %1143 = vst [vmem:[%s381 + $0x1c8] sm:$0xff] %v929
        %1144 = vst [vmem:[%s381 + $0x1d0] sm:$0xff] %v933
        %1145 = vst [vmem:[%s381 + $0x1d8] sm:$0xff] %v935
        %1146 = vst [vmem:[%s381 + $0x1e0] sm:$0xff] %v939
        %1147 = vst [vmem:[%s381 + $0x1e8] sm:$0xff] %v941
        %1148 = vst [vmem:[%s381 + $0x1f0] sm:$0xff] %v945
        %1149 = vst [vmem:[%s381 + $0x1f8] sm:$0xff] %v947
        %vm1150 = vcmask 523264
        %1151 = vst.msk [vmem:[%s388] sm:$0xff] %vm1150, %v1048
        %1152 = vst.msk [vmem:[%s388 + $0x8] sm:$0xff] %vm1150, %v1053
        %1153 = vst.msk [vmem:[%s388 + $0x10] sm:$0xff] %vm1150, %v1058
        %1154 = vst.msk [vmem:[%s388 + $0x18] sm:$0xff] %vm1150, %v1063
        %1155 = vst.msk [vmem:[%s388 + $0x20] sm:$0xff] %vm1150, %v1068
        %1156 = vst.msk [vmem:[%s388 + $0x28] sm:$0xff] %vm1150, %v1073
        %1157 = vst.msk [vmem:[%s388 + $0x30] sm:$0xff] %vm1150, %v1078
        %1158 = vst.msk [vmem:[%s388 + $0x38] sm:$0xff] %vm1150, %v1083
        %s1159 = sand.u32 %s174, 1
        %s1160 = scalar_lea.sflag [#allocation4], %s1159
        %s1161 = sand.u32 %s174, 1
        %s1162 = smul.addr %s1161, 512
        %s1163 = scalar_lea.vmem [#allocation11], %s1162
        %s1164 = sand.u32 %s200, 1
        %s1165 = scalar_lea.sflag [#allocation13], %s1164
        %s1166 = sand.u32 %s200, 1
        %s1167 = smul.addr %s1166, 64
        %s1168 = scalar_lea.vmem [#allocation12], %s1167
        // Predicated region
        $region65: #{diw_data_aug_test_forward.1} parent=43 // pred_check
          %p1169 = pneg %p184
        $region66: #{diw_data_aug_test_forward.1} parent=43 // pred_check_branch
          %1171 = sbr.rel (%p1169) target = $region68
        $region67: #{diw_data_aug_test_forward.1} parent=43 // pred_region
          %s1173 = ssub.s32 8192, 8192
          %1174 = vsyncadd %s1160, %s1173
          %s1175 = smul.addr %s30, 64
          %s1176 = smul.addr %s1175, 128
          %s1177 = scalar_lea.hbm %s6, %s1176
          %s1178 = sshll.u32 %s1163, 4
          %s1179 = int_to_ptr.vmem [resolvable:$true] %s1178
          %1184 = dma.vmem_to_hbm [thread:$0]  %s1179, 8192, %s1177, %s1160, 256, 256, 16
        $region68: #{diw_data_aug_test_forward.1} parent=43 // pred_fallthru
          _
        // Predicated region
        $region69: #{diw_data_aug_test_forward.1} parent=43 // pred_check
          %p1185 = pneg %p210
        $region70: #{diw_data_aug_test_forward.1} parent=43 // pred_check_branch
          %1187 = sbr.rel (%p1185) target = $region72
        $region71: #{diw_data_aug_test_forward.1} parent=43 // pred_region
          %s1189 = ssub.s32 1024, 1024
          %1190 = vsyncadd %s1165, %s1189
          %s1191 = smul.addr %s30, 8
          %s1192 = smul.addr %s1191, 128
          %s1193 = scalar_lea.hbm %s7, %s1192
          %s1194 = sshll.u32 %s1168, 4
          %s1195 = int_to_ptr.vmem [resolvable:$true] %s1194
          %1200 = dma.vmem_to_hbm [thread:$0]  %s1195, 1024, %s1193, %s1165, 128, 128, 8
        $region72: #{diw_data_aug_test_forward.1} parent=43 // pred_fallthru
          _
      $region44: #{diw_data_aug_test_forward.1} parent=5 // pred_fallthru
        _
      %p1201 = scmp.le.s32.totalorder 2, %s25
      // Predicated region
      $region73: #{diw_data_aug_test_forward.1} parent=5 // pred_check
        %p1202 = pneg %p1201
      $region74: #{diw_data_aug_test_forward.1} parent=5 // pred_check_branch
        %1204 = sbr.rel (%p1202) target = $region76
      $region75: #{diw_data_aug_test_forward.1} parent=5 // pred_region
        %s1205 = ssub.s32 %s25, 2
        // Predicated region
        $region77: #{diw_data_aug_test_forward.1} parent=75 // pred_check
          %p1206 = pneg %p190
        $region78: #{diw_data_aug_test_forward.1} parent=75 // pred_check_branch
          %1208 = sbr.rel (%p1206) target = $region80
        $region79: #{diw_data_aug_test_forward.1} parent=75 // pred_region
          %s1209 = sand.u32 %s175, 1
          %s1210 = scalar_lea.sflag [#allocation4], %s1209
          %s1211 = sand.u32 %s175, 1
          %s1212 = smul.addr %s1211, 512
          %s1213 = scalar_lea.vmem [#allocation11], %s1212
          %1214 = dma.done %s1210, 8192
        $region80: #{diw_data_aug_test_forward.1} parent=75 // pred_fallthru
          _
        // Predicated region
        $region81: #{diw_data_aug_test_forward.1} parent=75 // pred_check
          %p1215 = pneg %p216
        $region82: #{diw_data_aug_test_forward.1} parent=75 // pred_check_branch
          %1217 = sbr.rel (%p1215) target = $region84
        $region83: #{diw_data_aug_test_forward.1} parent=75 // pred_region
          %s1218 = sand.u32 %s201, 1
          %s1219 = scalar_lea.sflag [#allocation13], %s1218
          %s1220 = sand.u32 %s201, 1
          %s1221 = smul.addr %s1220, 64
          %s1222 = scalar_lea.vmem [#allocation12], %s1221
          %1223 = dma.done %s1219, 1024
        $region84: #{diw_data_aug_test_forward.1} parent=75 // pred_fallthru
          _
      $region76: #{diw_data_aug_test_forward.1} parent=5 // pred_fallthru
        _
    $region6: #{diw_data_aug_test_forward.1} parent=1 // loop_footer
      %s29 = sadd.s32 1, %s25
    $region7: #{diw_data_aug_test_forward.1} parent=1 // loop_footer_branch
      %24 = sbr.rel target = $region3
    $region8: #{diw_data_aug_test_forward.1} parent=1 // loop_exit
      _
    %1224 = vsyncpa [#allocation3], 1
    %s1225 = scalar_lea.sflag [#allocation3], 1
    %1226 = vsyncpa %s1225, 1
    %1227 = vsyncpa [#allocation6], 1
    %1228 = vsyncpa [#allocation9], 1
    %s1229 = scalar_lea.sflag [#allocation9], 1
    %1230 = vsyncpa %s1229, 1
    %1231 = vsyncpa [#allocation4], 1
    %s1232 = scalar_lea.sflag [#allocation4], 1
    %1233 = vsyncpa %s1232, 1
    %1234 = vsyncpa [#allocation13], 1
    %s1235 = scalar_lea.sflag [#allocation13], 1
    %1236 = vsyncpa %s1235, 1

</llo_original>
